<compile_context>
chip_gen: v7x
topology: tpu7x:2x2x1
jax: 0.10.0
libtpu: 0.0.40
codegen_flags: <defaults>
</compile_context>

<pallas_src>
import jax
import jax.numpy as jnp
from jax.experimental import pallas as pl
from jax.experimental.pallas import tpu as pltpu


def _nmse_partial_kernel(t_ref, p_ref, o_ref):
    """Accumulate per-slice partial sums into the resident (3, 8, 128) output block.

    o_ref rows: [0] sum(t), [1] sum(t*t), [2] sum((t-p)^2), kept vreg-shaped.
    """
    i = pl.program_id(1)  # inner reduction ("arbitrary") axis

    @pl.when(i == 0)
    def _():
        o_ref[...] = jnp.zeros_like(o_ref)

    t = t_ref[...].astype(jnp.float32)
    p = p_ref[...].astype(jnp.float32)
    d = t - p

    # (br, 128) -> (br/8, 8, 128): does not cross (8,128) tile boundaries, so it
    # stays a layout no-op; the leading-axis sums lower to elementwise VPU adds,
    # leaving the loop body bound only by the two vector-load streams.
    tr = t.reshape(-1, 8, 128)
    dr = d.reshape(-1, 8, 128)

    o_ref[0] += jnp.sum(tr, axis=0)
    o_ref[1] += jnp.sum(tr * tr, axis=0)
    o_ref[2] += jnp.sum(dr * dr, axis=0)


def _sublane_granule(dtype) -> int:
    # second-minor tile granularity: 8 rows (4-byte), 16 (2-byte), 32 (1-byte)
    return max(8, 32 // jnp.dtype(dtype).itemsize)


def _round_up(x: int, m: int) -> int:
    return ((x + m - 1) // m) * m


def nmse_loss(true_values, predicted_values, *, block_rows: int = 2048,
              num_slices: int = 2):
    """Pallas TPU implementation of NMSELoss.forward. Returns an f32 scalar."""
    assert true_values.shape == predicted_values.shape
    n_elems = true_values.size
    lanes = 128

    # Keep native dtypes; the kernel casts to f32 after the VMEM load.
    t = true_values.reshape(-1)
    p = predicted_values.reshape(-1)

    granule = max(_sublane_granule(t.dtype), _sublane_granule(p.dtype))
    rows = pl.cdiv(n_elems, lanes)
    br = _round_up(min(block_rows, rows), granule)            # tile rows

    n_tiles = pl.cdiv(rows, br)
    slices = num_slices if n_tiles >= num_slices else 1       # dual-TC split on v7x
    tiles_per_slice = pl.cdiv(n_tiles, slices)
    padded_rows = tiles_per_slice * slices * br
    pad = padded_rows * lanes - n_elems

    # Zero padding is safe: padded elements contribute 0 to every accumulated
    # sum, while the true element count n_elems is used in the scalar formulas.
    if pad:
        t = jnp.pad(t, (0, pad))
        p = jnp.pad(p, (0, pad))
    t = t.reshape(padded_rows, lanes)
    p = p.reshape(padded_rows, lanes)

    in_map = lambda s, i: (s * tiles_per_slice + i, 0)

    parts = pl.pallas_call(
        _nmse_partial_kernel,
        out_shape=jax.ShapeDtypeStruct((3 * slices, 8, lanes), jnp.float32),
        grid_spec=pltpu.PrefetchScalarGridSpec(
            num_scalar_prefetch=0,
            grid=(slices, tiles_per_slice),
            in_specs=[
                pl.BlockSpec((br, lanes), in_map),
                pl.BlockSpec((br, lanes), in_map),
            ],
            out_specs=pl.BlockSpec((3, 8, lanes), lambda s, i: (s, 0, 0)),
        ),
        compiler_params=pltpu.CompilerParams(
            dimension_semantics=("parallel", "arbitrary"),
        ),
    )(t, p)

    # Tiny cross-slice / cross-lane reduction + closed-form scalars (XLA side).
    sums = parts.reshape(slices, 3, 8, lanes).sum(axis=(0, 2, 3))
    s, s2, d2 = sums[0], sums[1], sums[2]
    n = jnp.float32(n_elems)
    var = (s2 - s * s / n) / (n - 1.0)        # unbiased variance over all elements
    # Matches the module as written: normalization by var**2 (((t-p)/var)^2).
    return d2 / (var * var) / n


def nmse_loss_ref(true_values, predicted_values):
    """Pure-JAX reference matching torch semantics (unbiased var)."""
    tt = true_values.astype(jnp.float32)
    pp = predicted_values.astype(jnp.float32)
    var = jnp.var(tt, ddof=1)
    return jnp.mean(((tt - pp) / var) ** 2)


if __name__ == "__main__":
    key = jax.random.PRNGKey(0)
    k1, k2, k3, k4 = jax.random.split(key, 4)

    # Main case: NCHW-like f32 tensors (the loss fully reduces; shape is irrelevant).
    t32 = jax.random.normal(k1, (2, 4, 16, 16), dtype=jnp.float32)
    p32 = t32 + 0.1 * jax.random.normal(k2, (2, 4, 16, 16), dtype=jnp.float32)
    out = jax.block_until_ready(nmse_loss(t32, p32))
    ref = jax.block_until_ready(nmse_loss_ref(t32, p32))
    assert out.shape == ()
    assert jnp.allclose(out, ref, rtol=1e-5, atol=1e-6), (out, ref)

    # Multi-tile + dual-slice ("parallel" axis) path, forced with a small tile.
    tm = jax.random.normal(k3, (4, 4, 32, 32), dtype=jnp.float32)
    pm = tm + 0.05 * jax.random.normal(k4, (4, 4, 32, 32), dtype=jnp.float32)
    out_m = jax.block_until_ready(nmse_loss(tm, pm, block_rows=32))
    ref_m = jax.block_until_ready(nmse_loss_ref(tm, pm))
    assert jnp.allclose(out_m, ref_m, rtol=1e-5, atol=1e-6), (out_m, ref_m)

    # Ragged bf16 case: exercises the zero-padded tail and the on-chip f32 cast.
    tb = jax.random.normal(k3, (3, 7, 11), dtype=jnp.bfloat16)
    pb = (tb.astype(jnp.float32)
          + 0.1 * jax.random.normal(k4, (3, 7, 11), dtype=jnp.float32)
          ).astype(jnp.bfloat16)
    out_b = jax.block_until_ready(nmse_loss(tb, pb))
    ref_b = jax.block_until_ready(nmse_loss_ref(tb, pb))
    assert jnp.allclose(out_b, ref_b, rtol=1e-4, atol=1e-5), (out_b, ref_b)

    print("KERNEL_OK")
</pallas_src>

<mosaic_0001>
module attributes {stable_mosaic.version = 11 : i64} {
  func.func @_nmse_partial_kernel(%arg0: i32, %arg1: i32, %arg2: memref<16x128xf32, #tpu.memory_space<vmem>>, %arg3: memref<16x128xf32, #tpu.memory_space<vmem>>, %arg4: memref<3x8x128xf32, #tpu.memory_space<vmem>>) attributes {dimension_semantics = [#tpu.dimension_semantics<parallel>, #tpu.dimension_semantics<arbitrary>], iteration_bounds = array<i64: 1, 1>, scalar_prefetch = 0 : i64, scratch_operands = 0 : i64, tpu.core_type = #tpu.core_type<tc>, window_params = [{transform_indices = @transform_0, window_bounds = array<i64: 16, 128>}, {transform_indices = @transform_1, window_bounds = array<i64: 16, 128>}, {transform_indices = @transform_2, window_bounds = array<i64: 3, 8, 128>}]} {
    %c0_i32 = arith.constant 0 : i32
    %0 = arith.cmpi eq, %arg1, %c0_i32 : i32
    %1 = arith.extui %0 : i1 to i32
    %c0_i32_0 = arith.constant 0 : i32
    %2 = arith.cmpi ne, %1, %c0_i32_0 : i32
    scf.if %2 {
      %cst_22 = arith.constant 0.000000e+00 : f32
      %31 = vector.broadcast %cst_22 : f32 to vector<3x8x128xf32>
      %c0_23 = arith.constant 0 : index
      %c0_24 = arith.constant 0 : index
      %c0_25 = arith.constant 0 : index
      %32 = vector.load %arg4[%c0_23, %c0_24, %c0_25] : memref<3x8x128xf32, #tpu.memory_space<vmem>>, vector<3x8x128xf32>
      tpu.vector_store %arg4[%c0_23, %c0_24, %c0_25], %31 {strides = array<i32>} : memref<3x8x128xf32, #tpu.memory_space<vmem>>, vector<3x8x128xf32>,
    } else {
    }
    %c0 = arith.constant 0 : index
    %c0_1 = arith.constant 0 : index
    %3 = vector.load %arg2[%c0, %c0_1] : memref<16x128xf32, #tpu.memory_space<vmem>>, vector<16x128xf32>
    %c0_2 = arith.constant 0 : index
    %c0_3 = arith.constant 0 : index
    %4 = vector.load %arg3[%c0_2, %c0_3] : memref<16x128xf32, #tpu.memory_space<vmem>>, vector<16x128xf32>
    %5 = arith.subf %3, %4 : vector<16x128xf32>
    %6 = vector.shape_cast %3 : vector<16x128xf32> to vector<2x8x128xf32>
    %7 = vector.shape_cast %5 : vector<16x128xf32> to vector<2x8x128xf32>
    %c0_4 = arith.constant 0 : index
    %c0_5 = arith.constant 0 : index
    %c0_6 = arith.constant 0 : index
    %8 = vector.load %arg4[%c0_4, %c0_5, %c0_6] : memref<3x8x128xf32, #tpu.memory_space<vmem>>, vector<1x8x128xf32>
    %9 = vector.shape_cast %8 : vector<1x8x128xf32> to vector<8x128xf32>
    %cst = arith.constant dense<0.000000e+00> : vector<8x128xf32>
    %10 = vector.multi_reduction <add>, %6, %cst [0] : vector<2x8x128xf32> to vector<8x128xf32>
    %11 = arith.addf %9, %10 : vector<8x128xf32>
    %c0_7 = arith.constant 0 : index
    %c0_8 = arith.constant 0 : index
    %c0_9 = arith.constant 0 : index
    %12 = vector.load %arg4[%c0_7, %c0_8, %c0_9] : memref<3x8x128xf32, #tpu.memory_space<vmem>>, vector<1x8x128xf32>
    %13 = vector.shape_cast %12 : vector<1x8x128xf32> to vector<8x128xf32>
    %14 = vector.shape_cast %11 : vector<8x128xf32> to vector<1x8x128xf32>
    tpu.vector_store %arg4[%c0_7, %c0_8, %c0_9], %14 {strides = array<i32>} : memref<3x8x128xf32, #tpu.memory_space<vmem>>, vector<1x8x128xf32>,
    %c1 = arith.constant 1 : index
    %c0_10 = arith.constant 0 : index
    %c0_11 = arith.constant 0 : index
    %15 = vector.load %arg4[%c1, %c0_10, %c0_11] : memref<3x8x128xf32, #tpu.memory_space<vmem>>, vector<1x8x128xf32>
    %16 = vector.shape_cast %15 : vector<1x8x128xf32> to vector<8x128xf32>
    %17 = arith.mulf %6, %6 : vector<2x8x128xf32>
    %cst_12 = arith.constant dense<0.000000e+00> : vector<8x128xf32>
    %18 = vector.multi_reduction <add>, %17, %cst_12 [0] : vector<2x8x128xf32> to vector<8x128xf32>
    %19 = arith.addf %16, %18 : vector<8x128xf32>
    %c1_13 = arith.constant 1 : index
    %c0_14 = arith.constant 0 : index
    %c0_15 = arith.constant 0 : index
    %20 = vector.load %arg4[%c1_13, %c0_14, %c0_15] : memref<3x8x128xf32, #tpu.memory_space<vmem>>, vector<1x8x128xf32>
    %21 = vector.shape_cast %20 : vector<1x8x128xf32> to vector<8x128xf32>
    %22 = vector.shape_cast %19 : vector<8x128xf32> to vector<1x8x128xf32>
    tpu.vector_store %arg4[%c1_13, %c0_14, %c0_15], %22 {strides = array<i32>} : memref<3x8x128xf32, #tpu.memory_space<vmem>>, vector<1x8x128xf32>,
    %c2 = arith.constant 2 : index
    %c0_16 = arith.constant 0 : index
    %c0_17 = arith.constant 0 : index
    %23 = vector.load %arg4[%c2, %c0_16, %c0_17] : memref<3x8x128xf32, #tpu.memory_space<vmem>>, vector<1x8x128xf32>
    %24 = vector.shape_cast %23 : vector<1x8x128xf32> to vector<8x128xf32>
    %25 = arith.mulf %7, %7 : vector<2x8x128xf32>
    %cst_18 = arith.constant dense<0.000000e+00> : vector<8x128xf32>
    %26 = vector.multi_reduction <add>, %25, %cst_18 [0] : vector<2x8x128xf32> to vector<8x128xf32>
    %27 = arith.addf %24, %26 : vector<8x128xf32>
    %c2_19 = arith.constant 2 : index
    %c0_20 = arith.constant 0 : index
    %c0_21 = arith.constant 0 : index
    %28 = vector.load %arg4[%c2_19, %c0_20, %c0_21] : memref<3x8x128xf32, #tpu.memory_space<vmem>>, vector<1x8x128xf32>
    %29 = vector.shape_cast %28 : vector<1x8x128xf32> to vector<8x128xf32>
    %30 = vector.shape_cast %27 : vector<8x128xf32> to vector<1x8x128xf32>
    tpu.vector_store %arg4[%c2_19, %c0_20, %c0_21], %30 {strides = array<i32>} : memref<3x8x128xf32, #tpu.memory_space<vmem>>, vector<1x8x128xf32>,
    return
  }
  func.func @transform_0(%arg0: i32, %arg1: i32) -> (i32, i32) {
    %c1_i32 = arith.constant 1 : i32
    %0 = arith.muli %arg0, %c1_i32 : i32
    %1 = arith.addi %0, %arg1 : i32
    %c0_i32 = arith.constant 0 : i32
    %c0_i32_0 = arith.constant 0 : i32
    return %1, %c0_i32 : i32, i32
  }
  func.func @transform_1(%arg0: i32, %arg1: i32) -> (i32, i32) {
    %c1_i32 = arith.constant 1 : i32
    %0 = arith.muli %arg0, %c1_i32 : i32
    %1 = arith.addi %0, %arg1 : i32
    %c0_i32 = arith.constant 0 : i32
    %c0_i32_0 = arith.constant 0 : i32
    return %1, %c0_i32 : i32, i32
  }
  func.func @transform_2(%arg0: i32, %arg1: i32) -> (i32, i32, i32) {
    %c0_i32 = arith.constant 0 : i32
    %c0_i32_0 = arith.constant 0 : i32
    %c0_i32_1 = arith.constant 0 : i32
    return %arg0, %c0_i32, %c0_i32_0 : i32, i32, i32
  }
}

</mosaic_0001>

<llo_original>
// kernel: tpu_custom_call.1
$region0: #{tpu_custom_call.1}
  #allocation0 [shape = 'u32[]', space=smem, size = 0x4, offset = 0x4, fixed_abs, tag = 'smem constant byte address 0x4 - core index']
  #allocation1 [shape = 'u32[144,128]{1,0:T(1,128)}', space=vmem, size = 0x12000, scoped, tag = 'internal scratch']
  %s0 = inlined_call_operand.hbm [shape: f32[16,128], index: 0, kind: input, shape index: {}]
  %s1 = inlined_call_operand.hbm [shape: f32[16,128], index: 1, kind: input, shape index: {}]
  %s2 = inlined_call_operand.hbm [shape: f32[3,8,128], index: 2, kind: output, shape index: {}]
  %s3 = sld [smem:[#allocation0]]
  $region30: #{tpu_custom_call.1} parent=0
    _
  %s5 = ssub.s32 1, %s3
  %s6 = scalar_select 0, %s5, %s3
  $region1: #{tpu_custom_call.1} parent=0
    #allocation2 [shape = 'u8[8192]{0}', space=vmem, size = 0x2000, scoped, tag = 'input window, operand 0, single buffered']
    #allocation3 [shape = 's32[1]{0}', space=sflag, size = 0x4, scoped, tag = 'scoped memory for tpu_custom_call.1']
    #allocation4 [shape = 's32[1]{0}', space=sflag, size = 0x4, scoped, tag = 'scoped memory for tpu_custom_call.1']
    #allocation5 [shape = 'u8[8192]{0}', space=vmem, size = 0x2000, scoped, tag = 'input window, operand 1, single buffered']
    #allocation6 [shape = 's32[1]{0}', space=sflag, size = 0x4, scoped, tag = 'scoped memory for tpu_custom_call.1']
    #allocation7 [shape = 'u8[12288]{0}', space=vmem, size = 0x3000, scoped, tag = 'output window, operand 0, single buffered']
    %7 = vsyncpa [#allocation3], 0
    %8 = vsyncpa [#allocation6], 0
    %9 = vsyncpa [#allocation4], 0
    // Predicated region
    $region2: #{tpu_custom_call.1} parent=1 // pred_check
      _
    $region3: #{tpu_custom_call.1} parent=1 // pred_check_branch
      %11 = sbr.rel (0) target = $region5
    $region4: #{tpu_custom_call.1} parent=1 // pred_region
      %s12 = sadd.s32 0, 0
      %s13 = smul.u32 2, %s12
      %s15 = ssub.s32 256, 256
      %16 = vsyncadd [#allocation3], %s15
      %s17 = smul.addr %s13, 128
      %s18 = scalar_lea.hbm %s0, %s17
      %s19 = sshll.u32 [#allocation2], 4
      %s20 = int_to_ptr.vmem [resolvable:$true] %s19
      %25 = dma.hbm_to_vmem [thread:$0]  %s18, 256, %s20, [#allocation3], 128, 128, 8
    $region5: #{tpu_custom_call.1} parent=1 // pred_fallthru
      _
    // Predicated region
    $region6: #{tpu_custom_call.1} parent=1 // pred_check
      _
    $region7: #{tpu_custom_call.1} parent=1 // pred_check_branch
      %27 = sbr.rel (0) target = $region9
    $region8: #{tpu_custom_call.1} parent=1 // pred_region
      %s28 = sadd.s32 0, 0
      %s29 = smul.u32 2, %s28
      %s31 = ssub.s32 256, 256
      %32 = vsyncadd [#allocation6], %s31
      %s33 = smul.addr %s29, 128
      %s34 = scalar_lea.hbm %s1, %s33
      %s35 = sshll.u32 [#allocation5], 4
      %s36 = int_to_ptr.vmem [resolvable:$true] %s35
      %41 = dma.hbm_to_vmem [thread:$0]  %s34, 256, %s36, [#allocation6], 128, 128, 8
    $region9: #{tpu_custom_call.1} parent=1 // pred_fallthru
      _
    // Predicated region
    $region10: #{tpu_custom_call.1} parent=1 // pred_check
      _
    $region11: #{tpu_custom_call.1} parent=1 // pred_check_branch
      %43 = sbr.rel (0) target = $region13
    $region12: #{tpu_custom_call.1} parent=1 // pred_region
      %44 = dma.done [#allocation3], 256
    $region13: #{tpu_custom_call.1} parent=1 // pred_fallthru
      _
    // Predicated region
    $region14: #{tpu_custom_call.1} parent=1 // pred_check
      _
    $region15: #{tpu_custom_call.1} parent=1 // pred_check_branch
      %46 = sbr.rel (0) target = $region17
    $region16: #{tpu_custom_call.1} parent=1 // pred_region
      %47 = dma.done [#allocation6], 256
    $region17: #{tpu_custom_call.1} parent=1 // pred_fallthru
      _
    %s48 = sadd.s32 0, 0
    %s49 = smul.u32 2, %s48
    %s50 = sadd.s32 0, 0
    %s51 = smul.u32 2, %s50
    %p52 = scmp.eq.s32.totalorder 0, 0
    // Predicated region
    $region18: #{tpu_custom_call.1} parent=1 // pred_check
      %p53 = pneg %p52
    $region19: #{tpu_custom_call.1} parent=1 // pred_check_branch
      %55 = sbr.rel (%p53) target = $region21
    $region20: #{tpu_custom_call.1} parent=1 // pred_region
      %56 = vst [vmem:[#allocation7] sm:$0xff] 0.0
      %57 = vst [vmem:[#allocation7 + $0x8] sm:$0xff] 0.0
      %58 = vst [vmem:[#allocation7 + $0x10] sm:$0xff] 0.0
    $region21: #{tpu_custom_call.1} parent=1 // pred_fallthru
      _
    %v59 = vld [vmem:[#allocation2] sm:$0xff]
    %v60 = vld [vmem:[#allocation2 + $0x8] sm:$0xff]
    %v61 = vld [vmem:[#allocation5] sm:$0xff]
    %v62 = vld [vmem:[#allocation5 + $0x8] sm:$0xff]
    %v63 = vsub.f32 %v59, %v61
    %v64 = vsub.f32 %v60, %v62
    %v65 = vld [vmem:[#allocation7] sm:$0xff]
    %v66 = vadd.f32 %v59, %v60
    %v67 = vadd.f32 %v65, %v66
    %68 = vst [vmem:[#allocation7] sm:$0xff] %v67
    %s69 = scalar_lea.vmem [#allocation7], 8
    %v70 = vld [vmem:[%s69] sm:$0xff]
    %v71 = vmul.f32 %v59, %v59
    %v72 = vmul.f32 %v60, %v60
    %v73 = vadd.f32 %v71, %v72
    %v74 = vadd.f32 %v70, %v73
    %75 = vst [vmem:[%s69] sm:$0xff] %v74
    %s76 = scalar_lea.vmem [#allocation7], 16
    %v77 = vld [vmem:[%s76] sm:$0xff]
    %v78 = vmul.f32 %v63, %v63
    %v79 = vmul.f32 %v64, %v64
    %v80 = vadd.f32 %v78, %v79
    %v81 = vadd.f32 %v77, %v80
    %82 = vst [vmem:[%s76] sm:$0xff] %v81
    // Predicated region
    $region22: #{tpu_custom_call.1} parent=1 // pred_check
      _
    $region23: #{tpu_custom_call.1} parent=1 // pred_check_branch
      %84 = sbr.rel (0) target = $region25
    $region24: #{tpu_custom_call.1} parent=1 // pred_region
      %s86 = ssub.s32 384, 384
      %87 = vsyncadd [#allocation4], %s86
      %s88 = sshll.u32 [#allocation7], 4
      %s89 = int_to_ptr.vmem [resolvable:$true] %s88
      %94 = dma.vmem_to_hbm [thread:$0]  %s89, 384, %s2, [#allocation4], 128, 128, 8
    $region25: #{tpu_custom_call.1} parent=1 // pred_fallthru
      _
    // Predicated region
    $region26: #{tpu_custom_call.1} parent=1 // pred_check
      _
    $region27: #{tpu_custom_call.1} parent=1 // pred_check_branch
      %96 = sbr.rel (0) target = $region29
    $region28: #{tpu_custom_call.1} parent=1 // pred_region
      %97 = dma.done [#allocation4], 384
    $region29: #{tpu_custom_call.1} parent=1 // pred_fallthru
      _
    %98 = vsyncpa [#allocation3], 1
    %99 = vsyncpa [#allocation6], 1
    %100 = vsyncpa [#allocation4], 1

</llo_original>
